<compile_context>
chip_gen: v7x
topology: tpu7x:2x2x1
jax: 0.10.0
libtpu: 0.0.40
codegen_flags: <defaults>
</compile_context>

<pallas_src>
import jax
import jax.numpy as jnp
from jax.experimental import pallas as pl
from jax.experimental.pallas import tpu as pltpu


def _round_up(x, m):
    return ((x + m - 1) // m) * m


def _ffn_kernel(x_ref, w1t_ref, wgt_ref, w2t_ref, o_ref, acc_ref):
    j = pl.program_id(1)                       # hidden-tile index (reduction axis)

    @pl.when(j == 0)
    def _():
        acc_ref[...] = jnp.zeros_like(acc_ref)

    x = x_ref[...]                                                       # (tm, dim) bf16
    h1 = jnp.dot(x, w1t_ref[...], preferred_element_type=jnp.float32)    # (tm, th) f32
    hg = jnp.dot(x, wgt_ref[...], preferred_element_type=jnp.float32)    # (tm, th) f32
    z = hg * h1                                    # gate * value (matches torch order)
    act = (z * jax.nn.sigmoid(z)).astype(jnp.bfloat16)   # SiLU in f32 -> bf16 for MXU
    acc_ref[...] += jnp.dot(act, w2t_ref[...], preferred_element_type=jnp.float32)

    @pl.when(j == pl.num_programs(1) - 1)
    def _():
        o_ref[...] = acc_ref[...].astype(o_ref.dtype)


def prepare_ffn_params(w1, w2, wg, dtype=jnp.bfloat16):
    """One-time prep: PyTorch nn.Linear weights ([out, in]) -> [in, out], bf16.

    Keep the results around and reuse them across calls so the transpose /
    cast is not paid on every forward pass.
    """
    return w1.T.astype(dtype), wg.T.astype(dtype), w2.T.astype(dtype)


def feed_forward(x, w1t, wgt, w2t, *, tm=256, th=512):
    """x: [batch, seq, dim].  w1t/wgt: [dim, hidden], w2t: [hidden, dim]
    (pre-transposed, bf16 — see prepare_ffn_params)."""
    B, S, dim = x.shape
    hidden = w1t.shape[1]
    M = B * S
    out_dtype = x.dtype

    # --- tile sizes -----------------------------------------------------------
    # M tile: big (MXU-friendly) but never larger than the (8-aligned) problem.
    tm_eff = min(tm, _round_up(M, 8))
    M_pad = _round_up(M, tm_eff)
    # hidden tile: multiple of 128 that divides hidden (else take hidden whole).
    if hidden % 128 == 0:
        th_eff = min(_round_up(th, 128), hidden)
        while hidden % th_eff:
            th_eff -= 128
    else:
        th_eff = hidden
    n_h = hidden // th_eff

    # --- input prep -----------------------------------------------------------
    x2d = x.reshape(M, dim).astype(jnp.bfloat16)
    if M_pad != M:
        x2d = jnp.pad(x2d, ((0, M_pad - M), (0, 0)))   # zero rows -> zero outputs

    itemsize_in = 2   # bf16
    cost = pl.CostEstimate(
        flops=6 * M * dim * hidden,                 # three M x dim x hidden matmuls
        transcendentals=M * hidden,                 # sigmoid in SiLU
        bytes_accessed=(M * dim * itemsize_in       # x
                        + 3 * dim * hidden * itemsize_in   # weights
                        + M * dim * jnp.dtype(out_dtype).itemsize),  # out
    )

    out2d = pl.pallas_call(
        _ffn_kernel,
        out_shape=jax.ShapeDtypeStruct((M_pad, dim), out_dtype),
        grid_spec=pltpu.PrefetchScalarGridSpec(
            num_scalar_prefetch=0,
            grid=(M_pad // tm_eff, n_h),
            in_specs=[
                pl.BlockSpec((tm_eff, dim), lambda i, j: (i, 0)),   # x tile
                pl.BlockSpec((dim, th_eff), lambda i, j: (0, j)),   # W1^T slab
                pl.BlockSpec((dim, th_eff), lambda i, j: (0, j)),   # Wg^T slab
                pl.BlockSpec((th_eff, dim), lambda i, j: (j, 0)),   # W2^T slab
            ],
            out_specs=pl.BlockSpec((tm_eff, dim), lambda i, j: (i, 0)),
            scratch_shapes=[pltpu.VMEM((tm_eff, dim), jnp.float32)],
        ),
        compiler_params=pltpu.CompilerParams(
            dimension_semantics=("parallel", "arbitrary")),
        cost_estimate=cost,
    )(x2d, w1t, wgt, w2t)

    return out2d[:M].reshape(B, S, dim)


def feed_forward_ref(x, w1, w2, wg):
    """Pure-JAX f32 reference matching the PyTorch module (PyTorch weight layout)."""
    h = (x @ wg.T) * (x @ w1.T)
    a = jax.nn.silu(h)
    return a @ w2.T


if __name__ == "__main__":
    key = jax.random.PRNGKey(0)
    # Small but lane-width-realistic shapes (dim/hidden >= 128) so the kernel
    # exercises full-lane layouts and >1 hidden tile (hidden // th_eff > 1).
    B, S, dim, hidden = 2, 8, 128, 512

    kx, k1, k2, kg = jax.random.split(key, 4)
    x = jax.random.normal(kx, (B, S, dim), dtype=jnp.float32)
    # nn.Linear weight shapes: [out, in]
    w1 = jax.random.normal(k1, (hidden, dim), dtype=jnp.float32) * 0.05
    w2 = jax.random.normal(k2, (dim, hidden), dtype=jnp.float32) * 0.05
    wg = jax.random.normal(kg, (hidden, dim), dtype=jnp.float32) * 0.05

    # One-time weight prep (transpose + bf16), reused across calls.
    w1t, wgt, w2t = prepare_ffn_params(w1, w2, wg)

    out = feed_forward(x, w1t, wgt, w2t, tm=256, th=256)
    out = jax.block_until_ready(out)

    ref = feed_forward_ref(x, w1, w2, wg)
    assert out.shape == (B, S, dim)
    max_err = float(jnp.max(jnp.abs(out - ref)))
    assert jnp.allclose(out, ref, atol=3e-2, rtol=3e-2), (
        f"mismatch vs reference (max abs err {max_err})")
    print("KERNEL_OK")
</pallas_src>

<mosaic_0001>
module attributes {stable_mosaic.version = 11 : i64} {
  func.func @_ffn_kernel(%arg0: i32, %arg1: i32, %arg2: memref<16x128xbf16, #tpu.memory_space<vmem>>, %arg3: memref<128x256xbf16, #tpu.memory_space<vmem>>, %arg4: memref<128x256xbf16, #tpu.memory_space<vmem>>, %arg5: memref<256x128xbf16, #tpu.memory_space<vmem>>, %arg6: memref<16x128xf32, #tpu.memory_space<vmem>>, %arg7: memref<16x128xf32, #tpu.memory_space<vmem>>) attributes {dimension_semantics = [#tpu.dimension_semantics<parallel>, #tpu.dimension_semantics<arbitrary>], iteration_bounds = array<i64: 1, 2>, scalar_prefetch = 0 : i64, scratch_operands = 1 : i64, tpu.core_type = #tpu.core_type<tc>, window_params = [{transform_indices = @transform_0, window_bounds = array<i64: 16, 128>}, {transform_indices = @transform_1, window_bounds = array<i64: 128, 256>}, {transform_indices = @transform_2, window_bounds = array<i64: 128, 256>}, {transform_indices = @transform_3, window_bounds = array<i64: 256, 128>}, {transform_indices = @transform_4, window_bounds = array<i64: 16, 128>}]} {
    %c0_i32 = arith.constant 0 : i32
    %0 = arith.cmpi eq, %arg1, %c0_i32 : i32
    %1 = arith.extui %0 : i1 to i32
    %c0_i32_0 = arith.constant 0 : i32
    %2 = arith.cmpi ne, %1, %c0_i32_0 : i32
    scf.if %2 {
      %cst_16 = arith.constant 0.000000e+00 : f32
      %24 = vector.broadcast %cst_16 : f32 to vector<16x128xf32>
      %c0_17 = arith.constant 0 : index
      %c0_18 = arith.constant 0 : index
      %25 = vector.load %arg7[%c0_17, %c0_18] : memref<16x128xf32, #tpu.memory_space<vmem>>, vector<16x128xf32>
      tpu.vector_store %arg7[%c0_17, %c0_18], %24 {strides = array<i32>} : memref<16x128xf32, #tpu.memory_space<vmem>>, vector<16x128xf32>,
    } else {
    }
    %c0 = arith.constant 0 : index
    %c0_1 = arith.constant 0 : index
    %3 = vector.load %arg2[%c0, %c0_1] : memref<16x128xbf16, #tpu.memory_space<vmem>>, vector<16x128xbf16>
    %c0_2 = arith.constant 0 : index
    %c0_3 = arith.constant 0 : index
    %4 = vector.load %arg3[%c0_2, %c0_3] : memref<128x256xbf16, #tpu.memory_space<vmem>>, vector<128x256xbf16>
    %cst = arith.constant dense<0.000000e+00> : vector<16x256xf32>
    %5 = tpu.matmul %3, %4, %cst {dimension_numbers = #tpu.dot_dimension_numbers<[1], [0], [0], [1], [0, 0, 1, 1], [], []>} : vector<16x128xbf16>, vector<128x256xbf16>, vector<16x256xf32> -> vector<16x256xf32>
    %c0_4 = arith.constant 0 : index
    %c0_5 = arith.constant 0 : index
    %6 = vector.load %arg4[%c0_4, %c0_5] : memref<128x256xbf16, #tpu.memory_space<vmem>>, vector<128x256xbf16>
    %cst_6 = arith.constant dense<0.000000e+00> : vector<16x256xf32>
    %7 = tpu.matmul %3, %6, %cst_6 {dimension_numbers = #tpu.dot_dimension_numbers<[1], [0], [0], [1], [0, 0, 1, 1], [], []>} : vector<16x128xbf16>, vector<128x256xbf16>, vector<16x256xf32> -> vector<16x256xf32>
    %8 = arith.mulf %7, %5 : vector<16x256xf32>
    %9 = arith.negf %8 : vector<16x256xf32>
    %10 = math.exp %9 : vector<16x256xf32>
    %cst_7 = arith.constant 1.000000e+00 : f32
    %11 = vector.broadcast %cst_7 : f32 to vector<16x256xf32>
    %12 = arith.addf %11, %10 : vector<16x256xf32>
    %13 = arith.divf %11, %12 : vector<16x256xf32>
    %14 = arith.mulf %8, %13 : vector<16x256xf32>
    %15 = arith.truncf %14 : vector<16x256xf32> to vector<16x256xbf16>
    %c0_8 = arith.constant 0 : index
    %c0_9 = arith.constant 0 : index
    %16 = vector.load %arg7[%c0_8, %c0_9] : memref<16x128xf32, #tpu.memory_space<vmem>>, vector<16x128xf32>
    %c0_10 = arith.constant 0 : index
    %c0_11 = arith.constant 0 : index
    %17 = vector.load %arg5[%c0_10, %c0_11] : memref<256x128xbf16, #tpu.memory_space<vmem>>, vector<256x128xbf16>
    %cst_12 = arith.constant dense<0.000000e+00> : vector<16x128xf32>
    %18 = tpu.matmul %15, %17, %cst_12 {dimension_numbers = #tpu.dot_dimension_numbers<[1], [0], [0], [1], [0, 0, 1, 1], [], []>} : vector<16x256xbf16>, vector<256x128xbf16>, vector<16x128xf32> -> vector<16x128xf32>
    %19 = arith.addf %16, %18 : vector<16x128xf32>
    %c0_13 = arith.constant 0 : index
    %c0_14 = arith.constant 0 : index
    %20 = vector.load %arg7[%c0_13, %c0_14] : memref<16x128xf32, #tpu.memory_space<vmem>>, vector<16x128xf32>
    tpu.vector_store %arg7[%c0_13, %c0_14], %19 {strides = array<i32>} : memref<16x128xf32, #tpu.memory_space<vmem>>, vector<16x128xf32>,
    %c1_i32 = arith.constant 1 : i32
    %21 = arith.cmpi eq, %arg1, %c1_i32 : i32
    %22 = arith.extui %21 : i1 to i32
    %c0_i32_15 = arith.constant 0 : i32
    %23 = arith.cmpi ne, %22, %c0_i32_15 : i32
    scf.if %23 {
      %c0_16 = arith.constant 0 : index
      %c0_17 = arith.constant 0 : index
      %24 = vector.load %arg7[%c0_16, %c0_17] : memref<16x128xf32, #tpu.memory_space<vmem>>, vector<16x128xf32>
      %c0_18 = arith.constant 0 : index
      %c0_19 = arith.constant 0 : index
      %25 = vector.load %arg6[%c0_18, %c0_19] : memref<16x128xf32, #tpu.memory_space<vmem>>, vector<16x128xf32>
      tpu.vector_store %arg6[%c0_18, %c0_19], %24 {strides = array<i32>} : memref<16x128xf32, #tpu.memory_space<vmem>>, vector<16x128xf32>,
    } else {
    }
    return
  }
  func.func @transform_0(%arg0: i32, %arg1: i32) -> (i32, i32) {
    %c0_i32 = arith.constant 0 : i32
    %c0_i32_0 = arith.constant 0 : i32
    return %arg0, %c0_i32 : i32, i32
  }
  func.func @transform_1(%arg0: i32, %arg1: i32) -> (i32, i32) {
    %c0_i32 = arith.constant 0 : i32
    %c0_i32_0 = arith.constant 0 : i32
    return %c0_i32, %arg1 : i32, i32
  }
  func.func @transform_2(%arg0: i32, %arg1: i32) -> (i32, i32) {
    %c0_i32 = arith.constant 0 : i32
    %c0_i32_0 = arith.constant 0 : i32
    return %c0_i32, %arg1 : i32, i32
  }
  func.func @transform_3(%arg0: i32, %arg1: i32) -> (i32, i32) {
    %c0_i32 = arith.constant 0 : i32
    %c0_i32_0 = arith.constant 0 : i32
    return %arg1, %c0_i32 : i32, i32
  }
  func.func @transform_4(%arg0: i32, %arg1: i32) -> (i32, i32) {
    %c0_i32 = arith.constant 0 : i32
    %c0_i32_0 = arith.constant 0 : i32
    return %arg0, %c0_i32 : i32, i32
  }
}

</mosaic_0001>

<llo_original>
// kernel: tpu_custom_call.1
$region0: #{tpu_custom_call.1}
  #allocation0 [shape = 'u32[]', space=smem, size = 0x4, offset = 0x4, fixed_abs, tag = 'smem constant byte address 0x4 - core index']
  #allocation1 [shape = 'u32[144,128]{1,0:T(1,128)}', space=vmem, size = 0x12000, scoped, tag = 'internal scratch']
  #allocation2 [shape = 'f32[16,128]{1,0:T(8,128)}', space=vmem, size = 0x2000, scoped, tag = 'scratch operand']
  %s0 = inlined_call_operand.hbm [shape: bf16[16,128], index: 0, kind: input, shape index: {}]
  %s1 = inlined_call_operand.hbm [shape: bf16[128,512], index: 1, kind: input, shape index: {}]
  %s2 = inlined_call_operand.hbm [shape: bf16[128,512], index: 2, kind: input, shape index: {}]
  %s3 = inlined_call_operand.hbm [shape: bf16[512,128], index: 3, kind: input, shape index: {}]
  %s4 = inlined_call_operand.hbm [shape: f32[16,128], index: 4, kind: output, shape index: {}]
  %s5 = sld [smem:[#allocation0]]
  $region73: #{tpu_custom_call.1} parent=0
    _
  %s7 = ssub.s32 1, %s5
  %s8 = scalar_select 0, %s7, %s5
  $region1: #{tpu_custom_call.1} parent=0
    #allocation3 [shape = 'u8[4096]{0}', space=vmem, size = 0x1000, scoped, tag = 'input window, operand 0, single buffered']
    #allocation4 [shape = 's32[2]{0}', space=sflag, size = 0x8, scoped, tag = 'scoped memory for tpu_custom_call.1']
    #allocation5 [shape = 's32[2]{0}', space=sflag, size = 0x8, scoped, tag = 'scoped memory for tpu_custom_call.1']
    #allocation6 [shape = 'u8[131072]{0}', space=vmem, size = 0x20000, scoped, tag = 'input window, operand 1']
    #allocation7 [shape = 's32[2]{0}', space=sflag, size = 0x8, scoped, tag = 'scoped memory for tpu_custom_call.1']
    #allocation8 [shape = 'u8[131072]{0}', space=vmem, size = 0x20000, scoped, tag = 'input window, operand 2']
    #allocation9 [shape = 'u8[131072]{0}', space=vmem, size = 0x20000, scoped, tag = 'input window, operand 3']
    #allocation10 [shape = 's32[2]{0}', space=sflag, size = 0x8, scoped, tag = 'scoped memory for tpu_custom_call.1']
    #allocation11 [shape = 'u8[8192]{0}', space=vmem, size = 0x2000, scoped, tag = 'output window, operand 0, single buffered']
    %9 = vsyncpa [#allocation4], 0
    %10 = vsyncpa [#allocation7], 0
    %s11 = scalar_lea.sflag [#allocation7], 1
    %12 = vsyncpa %s11, 0
    %13 = vsyncpa [#allocation10], 0
    %s14 = scalar_lea.sflag [#allocation10], 1
    %15 = vsyncpa %s14, 0
    %16 = vsyncpa [#allocation5], 0
    loop: start=0, step=1, limit=4
    $region2: #{tpu_custom_call.1} parent=1 // loop_pre_header
      _
    $region3: #{tpu_custom_call.1} parent=1 // loop_header
      %s18 = sphi 0, %s22
      %p19 = scmp.ge.s32.totalorder %s18, 4
      %s25 = sphi 0, %s37
      %s26 = sphi 0, %s33
      %s27 = sphi 0, %s25
      %s28 = sphi 0, %s26
      %s29 = sphi 0, %s27
      %s30 = sphi 0, %s28
      %s40 = sphi 0, %s42
      %s43 = sphi 0, %s40
      %s44 = sphi 0, %s43
      %s60 = sphi 0, %s44
      %s66 = sphi 0, %s68
      %s69 = sphi 0, %s66
      %s70 = sphi 0, %s69
      %s86 = sphi 0, %s70
      %s92 = sphi 0, %s94
      %s95 = sphi 0, %s92
      %s96 = sphi 0, %s95
      %s112 = sphi 0, %s96
      %s118 = sphi 0, %s120
      %s121 = sphi 0, %s118
      %s122 = sphi 0, %s121
      %s138 = sphi 0, %s122
      %s144 = sphi 0, %s146
      %s147 = sphi 0, %s144
      %s148 = sphi 0, %s147
      %s164 = sphi 0, %s148
    $region4: #{tpu_custom_call.1} parent=1 // loop_header_branch
      %21 = sbr.rel (%p19) target = $region8
    $region5: #{tpu_custom_call.1} parent=1 // loop_body
      %s23 = ssub.s32 %s18, 1
      %s24 = ssub.s32 %s18, 2
      %s31 = sadd.s32 1, %s26
      %p32 = scmp.ge.s32.totalorder %s31, 2
      %s33 = scalar_select %p32, 0, %s31
      %s34 = sadd.s32 1, %s25
      %s35 = scalar_select %p32, %s34, %s25
      %p36 = scmp.ge.s32.totalorder %s35, 1
      %s37 = scalar_select %p36, 0, %s35
      %s38 = ssub.s32 %s25, %s37
      %p39 = scmp.eq.s32.totalorder %s38, 0
      %s41 = sadd.s32 %s40, 1
      %s42 = scalar_select %p39, %s40, %s41
      %p45 = pneg %p39
      %p46 = scmp.eq.s32.totalorder %s18, 1
      %p47 = por %p45, %p46
      %p48 = scmp.ne.s32.totalorder %s40, %s43
      %p49 = scmp.eq.s32.totalorder %s18, 0
      %p50 = por %p48, %p49
      %p51 = scmp.ne.s32.totalorder %s40, %s43
      %p52 = scmp.eq.s32.totalorder %s23, 1
      %p53 = por %p51, %p52
      %p54 = scmp.ne.s32.totalorder %s43, %s44
      %p55 = scmp.eq.s32.totalorder %s23, 0
      %p56 = por %p54, %p55
      %p57 = scmp.ne.s32.totalorder %s43, %s44
      %p58 = scmp.eq.s32.totalorder %s24, 1
      %p59 = por %p57, %p58
      %p61 = scmp.ne.s32.totalorder %s44, %s60
      %p62 = scmp.eq.s32.totalorder %s24, 0
      %p63 = por %p61, %p62
      %s64 = ssub.s32 %s26, %s33
      %p65 = scmp.eq.s32.totalorder %s64, 0
      %s67 = sadd.s32 %s66, 1
      %s68 = scalar_select %p65, %s66, %s67
      %p71 = pneg %p65
      %p72 = scmp.eq.s32.totalorder %s18, 1
      %p73 = por %p71, %p72
      %p74 = scmp.ne.s32.totalorder %s66, %s69
      %p75 = scmp.eq.s32.totalorder %s18, 0
      %p76 = por %p74, %p75
      %p77 = scmp.ne.s32.totalorder %s66, %s69
      %p78 = scmp.eq.s32.totalorder %s23, 1
      %p79 = por %p77, %p78
      %p80 = scmp.ne.s32.totalorder %s69, %s70
      %p81 = scmp.eq.s32.totalorder %s23, 0
      %p82 = por %p80, %p81
      %p83 = scmp.ne.s32.totalorder %s69, %s70
      %p84 = scmp.eq.s32.totalorder %s24, 1
      %p85 = por %p83, %p84
      %p87 = scmp.ne.s32.totalorder %s70, %s86
      %p88 = scmp.eq.s32.totalorder %s24, 0
      %p89 = por %p87, %p88
      %s90 = ssub.s32 %s26, %s33
      %p91 = scmp.eq.s32.totalorder %s90, 0
      %s93 = sadd.s32 %s92, 1
      %s94 = scalar_select %p91, %s92, %s93
      %p97 = pneg %p91
      %p98 = scmp.eq.s32.totalorder %s18, 1
      %p99 = por %p97, %p98
      %p100 = scmp.ne.s32.totalorder %s92, %s95
      %p101 = scmp.eq.s32.totalorder %s18, 0
      %p102 = por %p100, %p101
      %p103 = scmp.ne.s32.totalorder %s92, %s95
      %p104 = scmp.eq.s32.totalorder %s23, 1
      %p105 = por %p103, %p104
      %p106 = scmp.ne.s32.totalorder %s95, %s96
      %p107 = scmp.eq.s32.totalorder %s23, 0
      %p108 = por %p106, %p107
      %p109 = scmp.ne.s32.totalorder %s95, %s96
      %p110 = scmp.eq.s32.totalorder %s24, 1
      %p111 = por %p109, %p110
      %p113 = scmp.ne.s32.totalorder %s96, %s112
      %p114 = scmp.eq.s32.totalorder %s24, 0
      %p115 = por %p113, %p114
      %s116 = ssub.s32 %s26, %s33
      %p117 = scmp.eq.s32.totalorder %s116, 0
      %s119 = sadd.s32 %s118, 1
      %s120 = scalar_select %p117, %s118, %s119
      %p123 = pneg %p117
      %p124 = scmp.eq.s32.totalorder %s18, 1
      %p125 = por %p123, %p124
      %p126 = scmp.ne.s32.totalorder %s118, %s121
      %p127 = scmp.eq.s32.totalorder %s18, 0
      %p128 = por %p126, %p127
      %p129 = scmp.ne.s32.totalorder %s118, %s121
      %p130 = scmp.eq.s32.totalorder %s23, 1
      %p131 = por %p129, %p130
      %p132 = scmp.ne.s32.totalorder %s121, %s122
      %p133 = scmp.eq.s32.totalorder %s23, 0
      %p134 = por %p132, %p133
      %p135 = scmp.ne.s32.totalorder %s121, %s122
      %p136 = scmp.eq.s32.totalorder %s24, 1
      %p137 = por %p135, %p136
      %p139 = scmp.ne.s32.totalorder %s122, %s138
      %p140 = scmp.eq.s32.totalorder %s24, 0
      %p141 = por %p139, %p140
      %s142 = ssub.s32 %s25, %s37
      %p143 = scmp.eq.s32.totalorder %s142, 0
      %s145 = sadd.s32 %s144, 1
      %s146 = scalar_select %p143, %s144, %s145
      %p149 = pneg %p143
      %p150 = scmp.eq.s32.totalorder %s18, 1
      %p151 = por %p149, %p150
      %p152 = scmp.ne.s32.totalorder %s144, %s147
      %p153 = scmp.eq.s32.totalorder %s18, 0
      %p154 = por %p152, %p153
      %p155 = scmp.ne.s32.totalorder %s144, %s147
      %p156 = scmp.eq.s32.totalorder %s23, 1
      %p157 = por %p155, %p156
      %p158 = scmp.ne.s32.totalorder %s147, %s148
      %p159 = scmp.eq.s32.totalorder %s23, 0
      %p160 = por %p158, %p159
      %p161 = scmp.ne.s32.totalorder %s147, %s148
      %p162 = scmp.eq.s32.totalorder %s24, 1
      %p163 = por %p161, %p162
      %p165 = scmp.ne.s32.totalorder %s148, %s164
      %p166 = scmp.eq.s32.totalorder %s24, 0
      %p167 = por %p165, %p166
      %p168 = scmp.le.s32.totalorder 1, %s18
      %p169 = scmp.lt.s32.totalorder %s18, 3
      %p170 = pnand %p168, %p169
      %p171 = pneg %p170
      // Predicated region
      $region9: #{tpu_custom_call.1} parent=5 // pred_check
        _
      $region10: #{tpu_custom_call.1} parent=5 // pred_check_branch
        %173 = sbr.rel (%p170) target = $region12
      $region11: #{tpu_custom_call.1} parent=5 // pred_region
        %s174 = ssub.s32 %s18, 1
        // Predicated region
        $region13: #{tpu_custom_call.1} parent=11 // pred_check
          %p175 = pneg %p56
        $region14: #{tpu_custom_call.1} parent=11 // pred_check_branch
          %177 = sbr.rel (%p175) target = $region16
        $region15: #{tpu_custom_call.1} parent=11 // pred_region
          %s178 = smul.u32 2, %s27
          %s180 = ssub.s32 128, 128
          %181 = vsyncadd [#allocation4], %s180
          %s182 = smul.addr %s178, 64
          %s183 = scalar_lea.hbm %s0, %s182
          %s184 = sshll.u32 [#allocation3], 4
          %s185 = int_to_ptr.vmem [resolvable:$true] %s184
          %190 = dma.hbm_to_vmem [thread:$0]  %s183, 128, %s185, [#allocation4], 64, 64, 4
        $region16: #{tpu_custom_call.1} parent=11 // pred_fallthru
          _
      $region12: #{tpu_custom_call.1} parent=5 // pred_fallthru
        _
      %p191 = scmp.lt.s32.totalorder %s18, 2
      // Predicated region
      $region17: #{tpu_custom_call.1} parent=5 // pred_check
        %p192 = pneg %p191
      $region18: #{tpu_custom_call.1} parent=5 // pred_check_branch
        %194 = sbr.rel (%p192) target = $region20
      $region19: #{tpu_custom_call.1} parent=5 // pred_region
        // Predicated region
        $region21: #{tpu_custom_call.1} parent=19 // pred_check
          %p195 = pneg %p76
        $region22: #{tpu_custom_call.1} parent=19 // pred_check_branch
          %197 = sbr.rel (%p195) target = $region24
        $region23: #{tpu_custom_call.1} parent=19 // pred_region
          %s198 = sand.u32 %s18, 1
          %s199 = scalar_lea.sflag [#allocation7], %s198
          %s200 = sand.u32 %s66, 1
          %s201 = smul.addr %s200, 128
          %s202 = scalar_lea.vmem [#allocation6], %s201
          %s203 = smul.u32 2, %s26
          %s205 = ssub.s32 2048, 2048
          %206 = vsyncadd %s199, %s205
          %s207 = smul.addr %s203, 64
          %s208 = scalar_lea.hbm %s1, %s207
          %s209 = sshll.u32 %s202, 4
          %s210 = int_to_ptr.vmem [resolvable:$true] %s209
          %215 = dma.hbm_to_vmem [thread:$0]  %s208, 2048, %s210, %s199, 256, 128, 8
        $region24: #{tpu_custom_call.1} parent=19 // pred_fallthru
          _
        // Predicated region
        $region25: #{tpu_custom_call.1} parent=19 // pred_check
          %p216 = pneg %p102
        $region26: #{tpu_custom_call.1} parent=19 // pred_check_branch
          %218 = sbr.rel (%p216) target = $region28
        $region27: #{tpu_custom_call.1} parent=19 // pred_region
          %s219 = sand.u32 %s18, 1
          %s220 = scalar_lea.sflag [#allocation7], %s219
          %s221 = sand.u32 %s92, 1
          %s222 = smul.addr %s221, 128
          %s223 = scalar_lea.vmem [#allocation8], %s222
          %s224 = smul.u32 2, %s26
          %s226 = ssub.s32 2048, 2048
          %227 = vsyncadd %s220, %s226
          %s228 = smul.addr %s224, 64
          %s229 = scalar_lea.hbm %s2, %s228
          %s230 = sshll.u32 %s223, 4
          %s231 = int_to_ptr.vmem [resolvable:$true] %s230
          %236 = dma.hbm_to_vmem [thread:$0]  %s229, 2048, %s231, %s220, 256, 128, 8
        $region28: #{tpu_custom_call.1} parent=19 // pred_fallthru
          _
        // Predicated region
        $region29: #{tpu_custom_call.1} parent=19 // pred_check
          %p237 = pneg %p128
        $region30: #{tpu_custom_call.1} parent=19 // pred_check_branch
          %239 = sbr.rel (%p237) target = $region32
        $region31: #{tpu_custom_call.1} parent=19 // pred_region
          %s240 = sand.u32 %s118, 1
          %s241 = scalar_lea.sflag [#allocation10], %s240
          %s242 = sand.u32 %s118, 1
          %s243 = smul.addr %s242, 128
          %s244 = scalar_lea.vmem [#allocation9], %s243
          %s245 = smul.u32 32, %s26
          %s247 = ssub.s32 2048, 2048
          %248 = vsyncadd %s241, %s247
          %s249 = smul.addr %s245, 64
          %s250 = scalar_lea.hbm %s3, %s249
          %s251 = sshll.u32 %s244, 4
          %s252 = int_to_ptr.vmem [resolvable:$true] %s251
          %257 = dma.hbm_to_vmem [thread:$0]  %s250, 2048, %s252, %s241, 64, 64, 4
        $region32: #{tpu_custom_call.1} parent=19 // pred_fallthru
          _
      $region20: #{tpu_custom_call.1} parent=5 // pred_fallthru
        _
      %p258 = scmp.le.s32.totalorder 1, %s18
      %p259 = scmp.lt.s32.totalorder %s18, 3
      %p260 = pnand %p258, %p259
      %p261 = pneg %p260
      // Predicated region
      $region33: #{tpu_custom_call.1} parent=5 // pred_check
        _
      $region34: #{tpu_custom_call.1} parent=5 // pred_check_branch
        %263 = sbr.rel (%p260) target = $region36
      $region35: #{tpu_custom_call.1} parent=5 // pred_region
        %s264 = ssub.s32 %s18, 1
        // Predicated region
        $region37: #{tpu_custom_call.1} parent=35 // pred_check
          %p265 = pneg %p56
        $region38: #{tpu_custom_call.1} parent=35 // pred_check_branch
          %267 = sbr.rel (%p265) target = $region40
        $region39: #{tpu_custom_call.1} parent=35 // pred_region
          %268 = dma.done [#allocation4], 128
        $region40: #{tpu_custom_call.1} parent=35 // pred_fallthru
          _
        %s269 = sand.u32 %s23, 1
        %s270 = scalar_lea.sflag [#allocation7], %s269
        %s271 = sand.u32 %s69, 1
        %s272 = smul.addr %s271, 128
        %s273 = scalar_lea.vmem [#allocation6], %s272
        // Predicated region
        $region41: #{tpu_custom_call.1} parent=35 // pred_check
          %p274 = pneg %p82
        $region42: #{tpu_custom_call.1} parent=35 // pred_check_branch
          %276 = sbr.rel (%p274) target = $region44
        $region43: #{tpu_custom_call.1} parent=35 // pred_region
          %277 = dma.done %s270, 2048
        $region44: #{tpu_custom_call.1} parent=35 // pred_fallthru
          _
        %s278 = sand.u32 %s23, 1
        %s279 = scalar_lea.sflag [#allocation7], %s278
        %s280 = sand.u32 %s95, 1
        %s281 = smul.addr %s280, 128
        %s282 = scalar_lea.vmem [#allocation8], %s281
        // Predicated region
        $region45: #{tpu_custom_call.1} parent=35 // pred_check
          %p283 = pneg %p108
        $region46: #{tpu_custom_call.1} parent=35 // pred_check_branch
          %285 = sbr.rel (%p283) target = $region48
        $region47: #{tpu_custom_call.1} parent=35 // pred_region
          %286 = dma.done %s279, 2048
        $region48: #{tpu_custom_call.1} parent=35 // pred_fallthru
          _
        %s287 = sand.u32 %s121, 1
        %s288 = scalar_lea.sflag [#allocation10], %s287
        %s289 = sand.u32 %s121, 1
        %s290 = smul.addr %s289, 128
        %s291 = scalar_lea.vmem [#allocation9], %s290
        // Predicated region
        $region49: #{tpu_custom_call.1} parent=35 // pred_check
          %p292 = pneg %p134
        $region50: #{tpu_custom_call.1} parent=35 // pred_check_branch
          %294 = sbr.rel (%p292) target = $region52
        $region51: #{tpu_custom_call.1} parent=35 // pred_region
          %295 = dma.done %s288, 2048
        $region52: #{tpu_custom_call.1} parent=35 // pred_fallthru
          _
        %p296 = pneg %p56
        %p297 = pneg %p53
        %s298 = sand.u32 %s23, 1
        %s299 = scalar_lea.sflag [#allocation7], %s298
        %s300 = sand.u32 %s69, 1
        %s301 = smul.addr %s300, 128
        %s302 = scalar_lea.vmem [#allocation6], %s301
        %p303 = pneg %p82
        %p304 = pneg %p79
        %s305 = sand.u32 %s23, 1
        %s306 = scalar_lea.sflag [#allocation7], %s305
        %s307 = sand.u32 %s95, 1
        %s308 = smul.addr %s307, 128
        %s309 = scalar_lea.vmem [#allocation8], %s308
        %p310 = pneg %p108
        %p311 = pneg %p105
        %s312 = sand.u32 %s121, 1
        %s313 = scalar_lea.sflag [#allocation10], %s312
        %s314 = sand.u32 %s121, 1
        %s315 = smul.addr %s314, 128
        %s316 = scalar_lea.vmem [#allocation9], %s315
        %p317 = pneg %p134
        %p318 = pneg %p131
        %p319 = pneg %p160
        %p320 = pneg %p157
        %s321 = smul.u32 2, %s27
        %s322 = smul.u32 2, %s28
        %s323 = smul.u32 2, %s28
        %s324 = smul.u32 32, %s28
        %s325 = smul.u32 2, %s27
        %p327 = scmp.eq.s32.totalorder %s28, 0
        // Predicated region
        $region53: #{tpu_custom_call.1} parent=35 // pred_check
          %p328 = pneg %p327
        $region54: #{tpu_custom_call.1} parent=35 // pred_check_branch
          %330 = sbr.rel (%p328) target = $region56
        $region55: #{tpu_custom_call.1} parent=35 // pred_region
          %331 = vst [vmem:[#allocation2] sm:$0xff] 0.0
          %332 = vst [vmem:[#allocation2 + $0x8] sm:$0xff] 0.0
        $region56: #{tpu_custom_call.1} parent=35 // pred_fallthru
          _
        %v333 = vld [vmem:[#allocation3] sm:$0xf]
        %v334 = vld [vmem:[#allocation3 + $0x4] sm:$0xf]
        %v335 = vld [vmem:[%s273] sm:$0xff]
        %v336 = vld [vmem:[%s273 + $0x8] sm:$0xff]
        %v337 = vld [vmem:[%s273 + $0x10] sm:$0xff]
        %v338 = vld [vmem:[%s273 + $0x18] sm:$0xff]
        %v339 = vld [vmem:[%s273 + $0x20] sm:$0xff]
        %v340 = vld [vmem:[%s273 + $0x28] sm:$0xff]
        %v341 = vld [vmem:[%s273 + $0x30] sm:$0xff]
        %v342 = vld [vmem:[%s273 + $0x38] sm:$0xff]
        %v343 = vld [vmem:[%s273 + $0x40] sm:$0xff]
        %v344 = vld [vmem:[%s273 + $0x48] sm:$0xff]
        %v345 = vld [vmem:[%s273 + $0x50] sm:$0xff]
        %v346 = vld [vmem:[%s273 + $0x58] sm:$0xff]
        %v347 = vld [vmem:[%s273 + $0x60] sm:$0xff]
        %v348 = vld [vmem:[%s273 + $0x68] sm:$0xff]
        %v349 = vld [vmem:[%s273 + $0x70] sm:$0xff]
        %v350 = vld [vmem:[%s273 + $0x78] sm:$0xff]
        %v353 = vunpack.c.l.b16 %v333
        %v354 = vunpack.c.l.b16 %v334
        %v355 = vpack.c.b16 %v354, %v353
        %v373 = vunpack.c.l.b16 %v335
        %v374 = vunpack.c.h.b16 %v335
        %v375 = vunpack.c.l.b16 %v336
        %v376 = vunpack.c.h.b16 %v336
        %v377 = vunpack.c.l.b16 %v337
        %v378 = vunpack.c.h.b16 %v337
        %v379 = vunpack.c.l.b16 %v338
        %v380 = vunpack.c.h.b16 %v338
        %v381 = vunpack.c.l.b16 %v339
        %v382 = vunpack.c.h.b16 %v339
        %v383 = vunpack.c.l.b16 %v340
        %v384 = vunpack.c.h.b16 %v340
        %v385 = vunpack.c.l.b16 %v341
        %v386 = vunpack.c.h.b16 %v341
        %v387 = vunpack.c.l.b16 %v342
        %v388 = vunpack.c.h.b16 %v342
        %v389 = vunpack.c.l.b16 %v343
        %v390 = vunpack.c.h.b16 %v343
        %v391 = vunpack.c.l.b16 %v344
        %v392 = vunpack.c.h.b16 %v344
        %v393 = vunpack.c.l.b16 %v345
        %v394 = vunpack.c.h.b16 %v345
        %v395 = vunpack.c.l.b16 %v346
        %v396 = vunpack.c.h.b16 %v346
        %v397 = vunpack.c.l.b16 %v347
        %v398 = vunpack.c.h.b16 %v347
        %v399 = vunpack.c.l.b16 %v348
        %v400 = vunpack.c.h.b16 %v348
        %v401 = vunpack.c.l.b16 %v349
        %v402 = vunpack.c.h.b16 %v349
        %v403 = vunpack.c.l.b16 %v350
        %v404 = vunpack.c.h.b16 %v350
        %v405 = vpack.c.b16 %v375, %v373
        %v406 = vpack.c.b16 %v376, %v374
        %v407 = vpack.c.b16 %v379, %v377
        %v408 = vpack.c.b16 %v380, %v378
        %v409 = vpack.c.b16 %v383, %v381
        %v410 = vpack.c.b16 %v384, %v382
        %v411 = vpack.c.b16 %v387, %v385
        %v412 = vpack.c.b16 %v388, %v386
        %v413 = vpack.c.b16 %v391, %v389
        %v414 = vpack.c.b16 %v392, %v390
        %v415 = vpack.c.b16 %v395, %v393
        %v416 = vpack.c.b16 %v396, %v394
        %v417 = vpack.c.b16 %v399, %v397
        %v418 = vpack.c.b16 %v400, %v398
        %v419 = vpack.c.b16 %v403, %v401
        %v420 = vpack.c.b16 %v404, %v402
        %437 = vmatprep.subr.bf16.mxu0 %v406
        %438 = vmatpush1.bf16.msra.mxu0 %v405
        %439 = vmatprep.subr.bf16.mxu0 %v408
        %440 = vmatpush1.bf16.msra.mxu0 %v407
        %441 = vmatprep.subr.bf16.mxu0 %v410
        %442 = vmatpush1.bf16.msra.mxu0 %v409
        %443 = vmatprep.subr.bf16.mxu0 %v412
        %444 = vmatpush1.bf16.msra.mxu0 %v411
        %445 = vmatprep.subr.bf16.mxu0 %v414
        %446 = vmatpush1.bf16.msra.mxu0 %v413
        %447 = vmatprep.subr.bf16.mxu0 %v416
        %448 = vmatpush1.bf16.msra.mxu0 %v415
        %449 = vmatprep.subr.bf16.mxu0 %v418
        %450 = vmatpush1.bf16.msra.mxu0 %v417
        %451 = vmatprep.subr.bf16.mxu0 %v420
        %452 = vmatpush1.bf16.msra.mxu0 %v419
        %453 = vmatprep.subr.bf16.mxu0 0
        %454 = vmatpush1.bf16.msra.mxu0 0
        %455 = vmatprep.subr.bf16.mxu0 0
        %456 = vmatpush1.bf16.msra.mxu0 0
        %457 = vmatprep.subr.bf16.mxu0 0
        %458 = vmatpush1.bf16.msra.mxu0 0
        %459 = vmatprep.subr.bf16.mxu0 0
        %460 = vmatpush1.bf16.msra.mxu0 0
        %461 = vmatprep.subr.bf16.mxu0 0
        %462 = vmatpush1.bf16.msra.mxu0 0
        %463 = vmatprep.subr.bf16.mxu0 0
        %464 = vmatpush1.bf16.msra.mxu0 0
        %465 = vmatprep.subr.bf16.mxu0 0
        %466 = vmatpush1.bf16.msra.mxu0 0
        %467 = vmatprep.subr.bf16.mxu0 0
        %468 = vmatpush1.bf16.msra.mxu0 0
        %469 = vmatprep.mubr.bf16.mxu0 0
        %470 = vmatmul.mubr.bf16.gmra.mrb[0].mxu0 %v355
        %v471 = vpop.f32.mrb[0].mxu0
        %v472 = vadd.f32 0.0, %v471
        %v473 = vpop.f32.mrb[0].mxu0
        %v474 = vadd.f32 0.0, %v473
        %v475 = vpop.f32.mrb[0].mxu0
        %v476 = vadd.f32 0.0, %v475
        %v477 = vpop.f32.mrb[0].mxu0
        %v478 = vadd.f32 0.0, %v477
        %479 = vdwg.mxu0
        %v480 = vld [vmem:[%s282] sm:$0xff]
        %v481 = vld [vmem:[%s282 + $0x8] sm:$0xff]
        %v482 = vld [vmem:[%s282 + $0x10] sm:$0xff]
        %v483 = vld [vmem:[%s282 + $0x18] sm:$0xff]
        %v484 = vld [vmem:[%s282 + $0x20] sm:$0xff]
        %v485 = vld [vmem:[%s282 + $0x28] sm:$0xff]
        %v486 = vld [vmem:[%s282 + $0x30] sm:$0xff]
        %v487 = vld [vmem:[%s282 + $0x38] sm:$0xff]
        %v488 = vld [vmem:[%s282 + $0x40] sm:$0xff]
        %v489 = vld [vmem:[%s282 + $0x48] sm:$0xff]
        %v490 = vld [vmem:[%s282 + $0x50] sm:$0xff]
        %v491 = vld [vmem:[%s282 + $0x58] sm:$0xff]
        %v492 = vld [vmem:[%s282 + $0x60] sm:$0xff]
        %v493 = vld [vmem:[%s282 + $0x68] sm:$0xff]
        %v494 = vld [vmem:[%s282 + $0x70] sm:$0xff]
        %v495 = vld [vmem:[%s282 + $0x78] sm:$0xff]
        %v512 = vunpack.c.l.b16 %v480
        %v513 = vunpack.c.h.b16 %v480
        %v514 = vunpack.c.l.b16 %v481
        %v515 = vunpack.c.h.b16 %v481
        %v516 = vunpack.c.l.b16 %v482
        %v517 = vunpack.c.h.b16 %v482
        %v518 = vunpack.c.l.b16 %v483
        %v519 = vunpack.c.h.b16 %v483
        %v520 = vunpack.c.l.b16 %v484
        %v521 = vunpack.c.h.b16 %v484
        %v522 = vunpack.c.l.b16 %v485
        %v523 = vunpack.c.h.b16 %v485
        %v524 = vunpack.c.l.b16 %v486
        %v525 = vunpack.c.h.b16 %v486
        %v526 = vunpack.c.l.b16 %v487
        %v527 = vunpack.c.h.b16 %v487
        %v528 = vunpack.c.l.b16 %v488
        %v529 = vunpack.c.h.b16 %v488
        %v530 = vunpack.c.l.b16 %v489
        %v531 = vunpack.c.h.b16 %v489
        %v532 = vunpack.c.l.b16 %v490
        %v533 = vunpack.c.h.b16 %v490
        %v534 = vunpack.c.l.b16 %v491
        %v535 = vunpack.c.h.b16 %v491
        %v536 = vunpack.c.l.b16 %v492
        %v537 = vunpack.c.h.b16 %v492
        %v538 = vunpack.c.l.b16 %v493
        %v539 = vunpack.c.h.b16 %v493
        %v540 = vunpack.c.l.b16 %v494
        %v541 = vunpack.c.h.b16 %v494
        %v542 = vunpack.c.l.b16 %v495
        %v543 = vunpack.c.h.b16 %v495
        %v544 = vpack.c.b16 %v514, %v512
        %v545 = vpack.c.b16 %v515, %v513
        %v546 = vpack.c.b16 %v518, %v516
        %v547 = vpack.c.b16 %v519, %v517
        %v548 = vpack.c.b16 %v522, %v520
        %v549 = vpack.c.b16 %v523, %v521
        %v550 = vpack.c.b16 %v526, %v524
        %v551 = vpack.c.b16 %v527, %v525
        %v552 = vpack.c.b16 %v530, %v528
        %v553 = vpack.c.b16 %v531, %v529
        %v554 = vpack.c.b16 %v534, %v532
        %v555 = vpack.c.b16 %v535, %v533
        %v556 = vpack.c.b16 %v538, %v536
        %v557 = vpack.c.b16 %v539, %v537
        %v558 = vpack.c.b16 %v542, %v540
        %v559 = vpack.c.b16 %v543, %v541
        %576 = vmatprep.subr.bf16.mxu0 %v545
        %577 = vmatpush1.bf16.msra.mxu0 %v544
        %578 = vmatprep.subr.bf16.mxu0 %v547
        %579 = vmatpush1.bf16.msra.mxu0 %v546
        %580 = vmatprep.subr.bf16.mxu0 %v549
        %581 = vmatpush1.bf16.msra.mxu0 %v548
        %582 = vmatprep.subr.bf16.mxu0 %v551
        %583 = vmatpush1.bf16.msra.mxu0 %v550
        %584 = vmatprep.subr.bf16.mxu0 %v553
        %585 = vmatpush1.bf16.msra.mxu0 %v552
        %586 = vmatprep.subr.bf16.mxu0 %v555
        %587 = vmatpush1.bf16.msra.mxu0 %v554
        %588 = vmatprep.subr.bf16.mxu0 %v557
        %589 = vmatpush1.bf16.msra.mxu0 %v556
        %590 = vmatprep.subr.bf16.mxu0 %v559
        %591 = vmatpush1.bf16.msra.mxu0 %v558
        %592 = vmatprep.subr.bf16.mxu0 0
        %593 = vmatpush1.bf16.msra.mxu0 0
        %594 = vmatprep.subr.bf16.mxu0 0
        %595 = vmatpush1.bf16.msra.mxu0 0
        %596 = vmatprep.subr.bf16.mxu0 0
        %597 = vmatpush1.bf16.msra.mxu0 0
        %598 = vmatprep.subr.bf16.mxu0 0
        %599 = vmatpush1.bf16.msra.mxu0 0
        %600 = vmatprep.subr.bf16.mxu0 0
        %601 = vmatpush1.bf16.msra.mxu0 0
        %602 = vmatprep.subr.bf16.mxu0 0
        %603 = vmatpush1.bf16.msra.mxu0 0
        %604 = vmatprep.subr.bf16.mxu0 0
        %605 = vmatpush1.bf16.msra.mxu0 0
        %606 = vmatprep.subr.bf16.mxu0 0
        %607 = vmatpush1.bf16.msra.mxu0 0
        %608 = vmatprep.mubr.bf16.mxu0 0
        %609 = vmatmul.mubr.bf16.gmra.mrb[0].mxu0 %v355
        %v610 = vpop.f32.mrb[0].mxu0
        %v611 = vadd.f32 0.0, %v610
        %v612 = vpop.f32.mrb[0].mxu0
        %v613 = vadd.f32 0.0, %v612
        %v614 = vpop.f32.mrb[0].mxu0
        %v615 = vadd.f32 0.0, %v614
        %v616 = vpop.f32.mrb[0].mxu0
        %v617 = vadd.f32 0.0, %v616
        %618 = vdwg.mxu0
        %v619 = vmul.f32 %v611, %v472
        %v620 = vmul.f32 %v613, %v474
        %v621 = vmul.f32 %v615, %v476
        %v622 = vmul.f32 %v617, %v478
        %v623 = vxor.u32 %v619, 2147483648
        %v624 = vxor.u32 %v620, 2147483648
        %v625 = vxor.u32 %v621, 2147483648
        %v626 = vxor.u32 %v622, 2147483648
        %v627 = vmul.f32 %v623, 1.442695
        %v628 = vpow.pop %v627
        %v629 = vmul.f32 %v624, 1.442695
        %v630 = vpow.pop %v629
        %v631 = vmul.f32 %v625, 1.442695
        %v632 = vpow.pop %v631
        %v633 = vmul.f32 %v626, 1.442695
        %v634 = vpow.pop %v633
        %v635 = vadd.f32 %v628, 1.0
        %v636 = vadd.f32 %v630, 1.0
        %v637 = vadd.f32 %v632, 1.0
        %v638 = vadd.f32 %v634, 1.0
        %v639 = vrcp.pop %v635
        %v640 = vmul.f32 1.0, %v639
        %v641 = vrcp.pop %v636
        %v642 = vmul.f32 1.0, %v641
        %v643 = vrcp.pop %v637
        %v644 = vmul.f32 1.0, %v643
        %v645 = vrcp.pop %v638
        %v646 = vmul.f32 1.0, %v645
        %v647 = vmul.f32 %v619, %v640
        %v648 = vmul.f32 %v620, %v642
        %v649 = vmul.f32 %v621, %v644
        %v650 = vmul.f32 %v622, %v646
        %v651 = vpack.c.bf16 %v649, %v647
        %v652 = vpack.c.bf16 %v650, %v648
        %v653 = vld [vmem:[#allocation2] sm:$0xff]
        %v654 = vld [vmem:[#allocation2 + $0x8] sm:$0xff]
        %v655 = vld [vmem:[%s291] sm:$0xf]
        %v656 = vld [vmem:[%s291 + $0x4] sm:$0xf]
        %v657 = vld [vmem:[%s291 + $0x8] sm:$0xf]
        %v658 = vld [vmem:[%s291 + $0xc] sm:$0xf]
        %v659 = vld [vmem:[%s291 + $0x10] sm:$0xf]
        %v660 = vld [vmem:[%s291 + $0x14] sm:$0xf]
        %v661 = vld [vmem:[%s291 + $0x18] sm:$0xf]
        %v662 = vld [vmem:[%s291 + $0x1c] sm:$0xf]
        %v663 = vld [vmem:[%s291 + $0x20] sm:$0xf]
        %v664 = vld [vmem:[%s291 + $0x24] sm:$0xf]
        %v665 = vld [vmem:[%s291 + $0x28] sm:$0xf]
        %v666 = vld [vmem:[%s291 + $0x2c] sm:$0xf]
        %v667 = vld [vmem:[%s291 + $0x30] sm:$0xf]
        %v668 = vld [vmem:[%s291 + $0x34] sm:$0xf]
        %v669 = vld [vmem:[%s291 + $0x38] sm:$0xf]
        %v670 = vld [vmem:[%s291 + $0x3c] sm:$0xf]
        %v671 = vld [vmem:[%s291 + $0x40] sm:$0xf]
        %v672 = vld [vmem:[%s291 + $0x44] sm:$0xf]
        %v673 = vld [vmem:[%s291 + $0x48] sm:$0xf]
        %v674 = vld [vmem:[%s291 + $0x4c] sm:$0xf]
        %v675 = vld [vmem:[%s291 + $0x50] sm:$0xf]
        %v676 = vld [vmem:[%s291 + $0x54] sm:$0xf]
        %v677 = vld [vmem:[%s291 + $0x58] sm:$0xf]
        %v678 = vld [vmem:[%s291 + $0x5c] sm:$0xf]
        %v679 = vld [vmem:[%s291 + $0x60] sm:$0xf]
        %v680 = vld [vmem:[%s291 + $0x64] sm:$0xf]
        %v681 = vld [vmem:[%s291 + $0x68] sm:$0xf]
        %v682 = vld [vmem:[%s291 + $0x6c] sm:$0xf]
        %v683 = vld [vmem:[%s291 + $0x70] sm:$0xf]
        %v684 = vld [vmem:[%s291 + $0x74] sm:$0xf]
        %v685 = vld [vmem:[%s291 + $0x78] sm:$0xf]
        %v686 = vld [vmem:[%s291 + $0x7c] sm:$0xf]
        %v719 = vunpack.c.l.b16 %v655
        %v720 = vunpack.c.l.b16 %v656
        %v721 = vunpack.c.l.b16 %v657
        %v722 = vunpack.c.l.b16 %v658
        %v723 = vunpack.c.l.b16 %v659
        %v724 = vunpack.c.l.b16 %v660
        %v725 = vunpack.c.l.b16 %v661
        %v726 = vunpack.c.l.b16 %v662
        %v727 = vunpack.c.l.b16 %v663
        %v728 = vunpack.c.l.b16 %v664
        %v729 = vunpack.c.l.b16 %v665
        %v730 = vunpack.c.l.b16 %v666
        %v731 = vunpack.c.l.b16 %v667
        %v732 = vunpack.c.l.b16 %v668
        %v733 = vunpack.c.l.b16 %v669
        %v734 = vunpack.c.l.b16 %v670
        %v735 = vunpack.c.l.b16 %v671
        %v736 = vunpack.c.l.b16 %v672
        %v737 = vunpack.c.l.b16 %v673
        %v738 = vunpack.c.l.b16 %v674
        %v739 = vunpack.c.l.b16 %v675
        %v740 = vunpack.c.l.b16 %v676
        %v741 = vunpack.c.l.b16 %v677
        %v742 = vunpack.c.l.b16 %v678
        %v743 = vunpack.c.l.b16 %v679
        %v744 = vunpack.c.l.b16 %v680
        %v745 = vunpack.c.l.b16 %v681
        %v746 = vunpack.c.l.b16 %v682
        %v747 = vunpack.c.l.b16 %v683
        %v748 = vunpack.c.l.b16 %v684
        %v749 = vunpack.c.l.b16 %v685
        %v750 = vunpack.c.l.b16 %v686
        %v751 = vpack.c.b16 %v720, %v719
        %v752 = vpack.c.b16 %v722, %v721
        %v753 = vpack.c.b16 %v724, %v723
        %v754 = vpack.c.b16 %v726, %v725
        %v755 = vpack.c.b16 %v728, %v727
        %v756 = vpack.c.b16 %v730, %v729
        %v757 = vpack.c.b16 %v732, %v731
        %v758 = vpack.c.b16 %v734, %v733
        %v759 = vpack.c.b16 %v736, %v735
        %v760 = vpack.c.b16 %v738, %v737
        %v761 = vpack.c.b16 %v740, %v739
        %v762 = vpack.c.b16 %v742, %v741
        %v763 = vpack.c.b16 %v744, %v743
        %v764 = vpack.c.b16 %v746, %v745
        %v765 = vpack.c.b16 %v748, %v747
        %v766 = vpack.c.b16 %v750, %v749
        %783 = vmatprep.subr.bf16.mxu0 0
        %784 = vmatpush1.bf16.msra.mxu0 %v751
        %785 = vmatprep.subr.bf16.mxu0 0
        %786 = vmatpush1.bf16.msra.mxu0 %v752
        %787 = vmatprep.subr.bf16.mxu0 0
        %788 = vmatpush1.bf16.msra.mxu0 %v753
        %789 = vmatprep.subr.bf16.mxu0 0
        %790 = vmatpush1.bf16.msra.mxu0 %v754
        %791 = vmatprep.subr.bf16.mxu0 0
        %792 = vmatpush1.bf16.msra.mxu0 %v755
        %793 = vmatprep.subr.bf16.mxu0 0
        %794 = vmatpush1.bf16.msra.mxu0 %v756
        %795 = vmatprep.subr.bf16.mxu0 0
        %796 = vmatpush1.bf16.msra.mxu0 %v757
        %797 = vmatprep.subr.bf16.mxu0 0
        %798 = vmatpush1.bf16.msra.mxu0 %v758
        %799 = vmatprep.subr.bf16.mxu0 0
        %800 = vmatpush1.bf16.msra.mxu0 %v759
        %801 = vmatprep.subr.bf16.mxu0 0
        %802 = vmatpush1.bf16.msra.mxu0 %v760
        %803 = vmatprep.subr.bf16.mxu0 0
        %804 = vmatpush1.bf16.msra.mxu0 %v761
        %805 = vmatprep.subr.bf16.mxu0 0
        %806 = vmatpush1.bf16.msra.mxu0 %v762
        %807 = vmatprep.subr.bf16.mxu0 0
        %808 = vmatpush1.bf16.msra.mxu0 %v763
        %809 = vmatprep.subr.bf16.mxu0 0
        %810 = vmatpush1.bf16.msra.mxu0 %v764
        %811 = vmatprep.subr.bf16.mxu0 0
        %812 = vmatpush1.bf16.msra.mxu0 %v765
        %813 = vmatprep.subr.bf16.mxu0 0
        %814 = vmatpush1.bf16.msra.mxu0 %v766
        %815 = vmatprep.mubr.bf16.mxu0 %v652
        %816 = vmatmul.mubr.bf16.gmra.mrb[0].mxu0 %v651
        %v817 = vpop.f32.mrb[0].mxu0
        %v818 = vadd.f32 0.0, %v817
        %v819 = vpop.f32.mrb[0].mxu0
        %v820 = vpop.f32.mrb[0].mxu0
        %v821 = vadd.f32 0.0, %v820
        %v822 = vpop.f32.mrb[0].mxu0
        %823 = vdwg.mxu0
        %v824 = vadd.f32 %v653, %v818
        %v825 = vadd.f32 %v654, %v821
        %826 = vst [vmem:[#allocation2] sm:$0xff] %v824
        %827 = vst [vmem:[#allocation2 + $0x8] sm:$0xff] %v825
        %p828 = scmp.eq.s32.totalorder %s28, 1
        // Predicated region
        $region57: #{tpu_custom_call.1} parent=35 // pred_check
          %p829 = pneg %p828
        $region58: #{tpu_custom_call.1} parent=35 // pred_check_branch
          %831 = sbr.rel (%p829) target = $region60
        $region59: #{tpu_custom_call.1} parent=35 // pred_region
          %v832 = vld [vmem:[#allocation2] sm:$0xff]
          %v833 = vld [vmem:[#allocation2 + $0x8] sm:$0xff]
          %834 = vst [vmem:[#allocation11] sm:$0xff] %v832
          %835 = vst [vmem:[#allocation11 + $0x8] sm:$0xff] %v833
        $region60: #{tpu_custom_call.1} parent=35 // pred_fallthru
          _
        // Predicated region
        $region61: #{tpu_custom_call.1} parent=35 // pred_check
          %p836 = pneg %p157
        $region62: #{tpu_custom_call.1} parent=35 // pred_check_branch
          %838 = sbr.rel (%p836) target = $region64
        $region63: #{tpu_custom_call.1} parent=35 // pred_region
          %s839 = smul.u32 2, %s27
          %s841 = ssub.s32 256, 256
          %842 = vsyncadd [#allocation5], %s841
          %s843 = smul.addr %s839, 128
          %s844 = scalar_lea.hbm %s4, %s843
          %s845 = sshll.u32 [#allocation11], 4
          %s846 = int_to_ptr.vmem [resolvable:$true] %s845
          %851 = dma.vmem_to_hbm [thread:$0]  %s846, 256, %s844, [#allocation5], 128, 128, 8
        $region64: #{tpu_custom_call.1} parent=35 // pred_fallthru
          _
        // Predicated region
        $region65: #{tpu_custom_call.1} parent=35 // pred_check
          %p852 = pneg %p157
        $region66: #{tpu_custom_call.1} parent=35 // pred_check_branch
          %854 = sbr.rel (%p852) target = $region68
        $region67: #{tpu_custom_call.1} parent=35 // pred_region
          %855 = dma.done [#allocation5], 256
        $region68: #{tpu_custom_call.1} parent=35 // pred_fallthru
          _
      $region36: #{tpu_custom_call.1} parent=5 // pred_fallthru
        _
      %p856 = scmp.le.s32.totalorder 2, %s18
      // Predicated region
      $region69: #{tpu_custom_call.1} parent=5 // pred_check
        %p857 = pneg %p856
      $region70: #{tpu_custom_call.1} parent=5 // pred_check_branch
        %859 = sbr.rel (%p857) target = $region72
      $region71: #{tpu_custom_call.1} parent=5 // pred_region
        %s860 = ssub.s32 %s18, 2
      $region72: #{tpu_custom_call.1} parent=5 // pred_fallthru
        _
    $region6: #{tpu_custom_call.1} parent=1 // loop_footer
      %s22 = sadd.s32 1, %s18
    $region7: #{tpu_custom_call.1} parent=1 // loop_footer_branch
      %17 = sbr.rel target = $region3
    $region8: #{tpu_custom_call.1} parent=1 // loop_exit
      _
    %861 = vsyncpa [#allocation4], 1
    %s862 = scalar_lea.sflag [#allocation4], 1
    %863 = vsyncpa %s862, 1
    %864 = vsyncpa [#allocation7], 1
    %s865 = scalar_lea.sflag [#allocation7], 1
    %866 = vsyncpa %s865, 1
    %867 = vsyncpa [#allocation10], 1
    %s868 = scalar_lea.sflag [#allocation10], 1
    %869 = vsyncpa %s868, 1
    %870 = vsyncpa [#allocation5], 1
    %s871 = scalar_lea.sflag [#allocation5], 1
    %872 = vsyncpa %s871, 1

</llo_original>
